<compile_context>
chip_gen: v7x
topology: tpu7x:2x2x1
jax: 0.10.0
libtpu: 0.0.40
codegen_flags: <defaults>
</compile_context>

<pallas_src>
import functools
import math

import numpy as np
import jax
import jax.numpy as jnp
from jax.experimental import pallas as pl
from jax.experimental.pallas import tpu as pltpu


KH, KW = 3, 9                    # kernel_size = (3, 9)
PH, PW = KH - 1, KW - 1          # circular padding = (2, 8)
INV = 1.0 / (KH * KW)            # 1/27 per stage (baked into the band matrices)

_MAX_LANE_WIDTH = 1024           # cap on folded lane width (block-diag B <= 4 MiB f32)
_MAX_ROW_TILE = 512              # cap on the output-row tile


# --------------------------- constant band filter matrices ---------------------------

def _circulant_band(n, taps):
    """M[i, (i + s) % n] += taps[s + r] for s in [-r, r]; '+=' handles wrap aliasing."""
    r = len(taps) // 2
    m = np.zeros((n, n), np.float64)
    idx = np.arange(n)
    for s, w in zip(range(-r, r + 1), taps):
        m[idx, (idx + s) % n] += w
    return m


@functools.lru_cache(maxsize=None)
def _filters_np(h, w, h_pad, tile_n):
    """Row filter A (h_pad x h_pad) and block-diagonal column filter (tile_n*w)^2."""
    tv = np.arange(1, KH + 1, dtype=np.float64)
    tv = np.concatenate([tv, tv[-2::-1]]) * INV              # [1,2,3,2,1]/27
    th = np.arange(1, KW + 1, dtype=np.float64)
    th = np.concatenate([th, th[-2::-1]]) * INV              # [1,..,9,..,2,1]/27
    a = _circulant_band(h, tv)                               # A[i,(i+s)%h]  = tv[s+2]
    if h_pad != h:                                           # zero-embed so blocks stay
        a_emb = np.zeros((h_pad, h_pad), np.float64)         # (8,128)-aligned; padded rows
        a_emb[:h, :h] = a                                    # produce zeros, sliced off
        a = a_emb
    b = _circulant_band(w, th).T                             # B[(j+t)%w, j] = th[t+8]
    b_blk = np.kron(np.eye(tile_n), b)                       # per-sample column filter
    return a.astype(np.float32), b_blk.astype(np.float32)


def _pick_row_tile(h_pad, n_batch_tiles, max_th=_MAX_ROW_TILE):
    """Output-row tile (divides h_pad; multiple of 8 when < h_pad).

    Keep one chunky step per batch tile unless (a) the batch axis alone gives < 2 grid
    steps -- row tiling then lets v7x's 2nd TensorCore share the work -- or (b) h_pad is
    large, where row tiling bounds the (row_tile, H)/(row_tile, LW) block footprints."""
    if n_batch_tiles >= 2 and h_pad <= max_th:
        return h_pad
    cands = [d for d in range(8, h_pad, 8) if h_pad % d == 0 and d <= max_th]
    return max(cands) if cands else h_pad


# ----------------------------------- kernel ------------------------------------------

def convae2d_kernel(a_ref, b_ref, x_ref, o_ref):
    """One grid step:  o = relu(A_rows @ X @ B_blockdiag)  -- two fused MXU matmuls.

    a_ref : (row_tile, HP)  this row-tile of the pre-scaled circular row filter
    b_ref : (LW, LW)        block-diagonal pre-scaled circular column filter (constant)
    x_ref : (HP, LW)        one batch tile (samples folded into lanes, or one sample)
    o_ref : (row_tile, LW)
    """
    t = jnp.dot(a_ref[...], x_ref[...], preferred_element_type=jnp.float32)   # row stage
    o = jnp.dot(t, b_ref[...], preferred_element_type=jnp.float32)            # col stage
    o_ref[...] = jnp.maximum(o, 0.0).astype(o_ref.dtype)                      # fused ReLU


# ----------------------------------- wrapper -----------------------------------------

def convae2d_forward(x):
    """x: (N, 1, H, W) -> (N, 1, H, W) float32; same math as ConvAE2d.forward."""
    N, C, H, W = x.shape
    assert C == 1, "module is defined with in_channels = out_channels = 1"
    assert H >= PH and W >= PW, "circular padding requires pad <= spatial dim"

    x3 = x.reshape(N, H, W)                  # free reshape (C == 1); dtype passed through
    fold = 128 // math.gcd(W, 128)           # smallest fold with (fold * W) % 128 == 0

    if W % 128 == 0 and H % 8 == 0:
        # Natural layout is already lane-dense: one sample per batch tile, zero wrapper
        # copies (reshapes of leading dims are free).
        lanes, tile_n, n_pad, h_pad = False, 1, N, H
        x2 = x3.reshape(N * H, W)
    elif fold * W <= _MAX_LANE_WIDTH:
        # Fold `fold` samples into the lane axis so every store is an unmasked lane-dense
        # vst.  One wrapper-side transpose(+pad) copy = layout plumbing; it replaces the
        # previous version's masked stores and its separate astype / batch-pad passes.
        lanes, tile_n = True, fold
        n_pad = -(-N // fold) * fold
        h_pad = -(-H // 8) * 8
        xt = jnp.transpose(x3, (1, 0, 2))                        # (H, N, W)
        if h_pad != H or n_pad != N:
            xt = jnp.pad(xt, ((0, h_pad - H), (0, n_pad - N), (0, 0)))
        x2 = xt.reshape(h_pad, n_pad * W)
    elif H % 8 == 0:
        # TODO(synk): awkward W (lcm(W,128) too large to fold) -- fall back to the
        # natural layout and accept masked stores on the W lanes.
        lanes, tile_n, n_pad, h_pad = False, 1, N, H
        x2 = x3.reshape(N * H, W)
    else:
        raise NotImplementedError(f"unsupported spatial shape H={H}, W={W}")

    lw = tile_n * W                              # lane width of every block
    n_bt = n_pad // tile_n                       # batch tiles
    row_tile = _pick_row_tile(h_pad, n_bt)       # output-row tile
    n_ht = h_pad // row_tile                     # row tiles

    a_np, b_np = _filters_np(H, W, h_pad, tile_n)
    a, b_blk = jnp.asarray(a_np), jnp.asarray(b_np)

    if lanes:
        out_2d = (h_pad, n_pad * W)
        x_spec = pl.BlockSpec((h_pad, lw), lambda g, h: (0, g))
        o_spec = pl.BlockSpec((row_tile, lw), lambda g, h: (h, g))
    else:
        out_2d = (n_pad * H, W)
        x_spec = pl.BlockSpec((h_pad, lw), lambda g, h: (g, 0))
        o_spec = pl.BlockSpec((row_tile, lw), lambda g, h: (g * n_ht + h, 0))

    # VMEM: every block is double-buffered by the pipeline (A / block-diag B have
    # constant block indices, so they are copied only once but still hold 2 buffers).
    # 2x headroom covers the (row_tile, lw) f32 intermediate; the cap keeps the same
    # sizing safe on v7x's 64 MiB VMEM (v5e/v6e's 128 MiB simply keeps more slack).
    vmem_need = 8 * (h_pad * lw + row_tile * lw + row_tile * h_pad + lw * lw)   # bytes
    vmem_limit = int(min(max(2 * vmem_need, 32 << 20), 48 << 20))

    out2 = pl.pallas_call(
        convae2d_kernel,
        out_shape=jax.ShapeDtypeStruct(out_2d, jnp.float32),
        grid_spec=pltpu.PrefetchScalarGridSpec(
            num_scalar_prefetch=0,
            grid=(n_bt, n_ht),                   # (batch tiles, row tiles); rows innermost
            in_specs=[
                pl.BlockSpec((row_tile, h_pad), lambda g, h: (h, 0)),   # row-filter tile
                pl.BlockSpec((lw, lw), lambda g, h: (0, 0)),            # constant col filter
                x_spec,                                                 # resident across rows
            ],
            out_specs=o_spec,
        ),
        compiler_params=pltpu.CompilerParams(
            dimension_semantics=("parallel", "parallel"),               # megacore-shardable
            vmem_limit_bytes=vmem_limit,
        ),
    )(a, b_blk, x2)

    if lanes:
        out = out2.reshape(h_pad, n_pad, W)[:H].transpose(1, 0, 2)[:N]
    else:
        out = out2.reshape(N, H, W)
    return out.reshape(N, 1, H, W)


# ------------------------------ plain-JAX reference ----------------------------------

def _circular_pad(x3, ph, pw):
    x3 = jnp.concatenate([x3[:, -ph:, :], x3, x3[:, :ph, :]], axis=1)
    x3 = jnp.concatenate([x3[:, :, -pw:], x3, x3[:, :, :pw]], axis=2)
    return x3


def convae2d_reference(x):
    """Direct two-stage transcription of the PyTorch module (for verification)."""
    N, C, H, W = x.shape
    x3 = x.reshape(N, H, W).astype(jnp.float32)
    xp = _circular_pad(x3, PH, PW)                      # Conv2d's circular padding
    H1, W1 = H + PH, W + PW
    y = jnp.zeros((N, H1, W1), jnp.float32)             # Conv2d(1->1,(3,9),circular)
    for a in range(KH):
        for b in range(KW):
            y = y + xp[:, a:a + H1, b:b + W1]
    y = y * INV
    o = jnp.zeros((N, H, W), jnp.float32)               # ConvTranspose2d(1->1,(3,9),pad=(2,8))
    for a in range(KH):
        for b in range(KW):
            o = o + y[:, a:a + H, b:b + W]
    o = o * INV
    return jnp.maximum(o, 0.0).reshape(N, 1, H, W)


if __name__ == "__main__":
    key = jax.random.PRNGKey(0)
    # NCHW with in_channels = 1, as the module defines.
    cases = [
        (2, 1, 16, 16),    # toy size: W < 128 -> batch folded into lanes (lane-dense stores)
        (3, 1, 4, 8),      # wrap-aliasing edge: composite taps span > H and >= W
        (2, 1, 8, 128),    # W % 128 == 0 -> natural layout, no wrapper transpose
    ]
    for i, (n, c, h, w) in enumerate(cases):
        xin = jax.random.normal(jax.random.fold_in(key, i), (n, c, h, w), dtype=jnp.float32)
        out = jax.block_until_ready(convae2d_forward(xin))
        ref = jax.block_until_ready(convae2d_reference(xin))
        assert out.shape == (n, c, h, w)
        err = float(jnp.max(jnp.abs(out - ref)))
        assert jnp.allclose(out, ref, atol=1e-4, rtol=1e-4), (n, c, h, w, err)
    print("KERNEL_OK")
</pallas_src>

<mosaic_0001>
module attributes {stable_mosaic.version = 11 : i64} {
  func.func @convae2d_kernel(%arg0: i32, %arg1: i32, %arg2: memref<8x16xf32, #tpu.memory_space<vmem>>, %arg3: memref<128x128xf32, #tpu.memory_space<vmem>>, %arg4: memref<16x128xf32, #tpu.memory_space<vmem>>, %arg5: memref<8x128xf32, #tpu.memory_space<vmem>>) attributes {dimension_semantics = [#tpu.dimension_semantics<parallel>, #tpu.dimension_semantics<parallel>], iteration_bounds = array<i64: 1, 2>, scalar_prefetch = 0 : i64, scratch_operands = 0 : i64, tpu.core_type = #tpu.core_type<tc>, window_params = [{transform_indices = @transform_0, window_bounds = array<i64: 8, 16>}, {pipeline_mode = #tpu.pipeline_mode<synchronous>, transform_indices = @transform_1, window_bounds = array<i64: 128, 128>}, {transform_indices = @transform_2, window_bounds = array<i64: 16, 128>}, {transform_indices = @transform_3, window_bounds = array<i64: 8, 128>}]} {
    %c0 = arith.constant 0 : index
    %c0_0 = arith.constant 0 : index
    %0 = vector.load %arg2[%c0, %c0_0] : memref<8x16xf32, #tpu.memory_space<vmem>>, vector<8x16xf32>
    %c0_1 = arith.constant 0 : index
    %c0_2 = arith.constant 0 : index
    %1 = vector.load %arg4[%c0_1, %c0_2] : memref<16x128xf32, #tpu.memory_space<vmem>>, vector<16x128xf32>
    %cst = arith.constant dense<0.000000e+00> : vector<8x128xf32>
    %2 = tpu.matmul %0, %1, %cst {dimension_numbers = #tpu.dot_dimension_numbers<[1], [0], [0], [1], [0, 0, 1, 1], [], []>} : vector<8x16xf32>, vector<16x128xf32>, vector<8x128xf32> -> vector<8x128xf32>
    %c0_3 = arith.constant 0 : index
    %c0_4 = arith.constant 0 : index
    %3 = vector.load %arg3[%c0_3, %c0_4] : memref<128x128xf32, #tpu.memory_space<vmem>>, vector<128x128xf32>
    %cst_5 = arith.constant dense<0.000000e+00> : vector<8x128xf32>
    %4 = tpu.matmul %2, %3, %cst_5 {dimension_numbers = #tpu.dot_dimension_numbers<[1], [0], [0], [1], [0, 0, 1, 1], [], []>} : vector<8x128xf32>, vector<128x128xf32>, vector<8x128xf32> -> vector<8x128xf32>
    %cst_6 = arith.constant 0.000000e+00 : f32
    %5 = vector.broadcast %cst_6 : f32 to vector<8x128xf32>
    %6 = arith.maximumf %4, %5 : vector<8x128xf32>
    %c0_7 = arith.constant 0 : index
    %c0_8 = arith.constant 0 : index
    %7 = vector.load %arg5[%c0_7, %c0_8] : memref<8x128xf32, #tpu.memory_space<vmem>>, vector<8x128xf32>
    tpu.vector_store %arg5[%c0_7, %c0_8], %6 {strides = array<i32>} : memref<8x128xf32, #tpu.memory_space<vmem>>, vector<8x128xf32>,
    return
  }
  func.func @transform_0(%arg0: i32, %arg1: i32) -> (i32, i32) {
    %c0_i32 = arith.constant 0 : i32
    %c0_i32_0 = arith.constant 0 : i32
    return %arg1, %c0_i32 : i32, i32
  }
  func.func @transform_1(%arg0: i32, %arg1: i32) -> (i32, i32) {
    %c0_i32 = arith.constant 0 : i32
    %c0_i32_0 = arith.constant 0 : i32
    %c0_i32_1 = arith.constant 0 : i32
    return %c0_i32, %c0_i32_0 : i32, i32
  }
  func.func @transform_2(%arg0: i32, %arg1: i32) -> (i32, i32) {
    %c0_i32 = arith.constant 0 : i32
    %c0_i32_0 = arith.constant 0 : i32
    return %c0_i32, %arg0 : i32, i32
  }
  func.func @transform_3(%arg0: i32, %arg1: i32) -> (i32, i32) {
    %c0_i32 = arith.constant 0 : i32
    return %arg1, %arg0 : i32, i32
  }
}

</mosaic_0001>

<llo_original>
// kernel: tpu_custom_call.1
$region0: #{tpu_custom_call.1}
  #allocation0 [shape = 'u32[]', space=smem, size = 0x4, offset = 0x4, fixed_abs, tag = 'smem constant byte address 0x4 - core index']
  #allocation1 [shape = 'u32[144,128]{1,0:T(1,128)}', space=vmem, size = 0x12000, scoped, tag = 'internal scratch']
  %s0 = inlined_call_operand.hbm [shape: f32[16,16], index: 0, kind: input, shape index: {}]
  %s1 = inlined_call_operand.hbm [shape: f32[128,128], index: 1, kind: input, shape index: {}]
  %s2 = inlined_call_operand.hbm [shape: f32[16,128], index: 2, kind: input, shape index: {}]
  %s3 = inlined_call_operand.hbm [shape: f32[16,128], index: 3, kind: output, shape index: {}]
  %s4 = sld [smem:[#allocation0]]
  $region57: #{tpu_custom_call.1} parent=0
    _
  %s6 = ssub.s32 1, %s4
  %s7 = scalar_select 0, %s6, %s4
  $region1: #{tpu_custom_call.1} parent=0
    #allocation2 [shape = 'u8[8192]{0}', space=vmem, size = 0x2000, scoped, tag = 'input window, operand 0']
    #allocation3 [shape = 's32[2]{0}', space=sflag, size = 0x8, scoped, tag = 'scoped memory for tpu_custom_call.1']
    #allocation4 [shape = 's32[2]{0}', space=sflag, size = 0x8, scoped, tag = 'scoped memory for tpu_custom_call.1']
    #allocation5 [shape = 'u8[65536]{0}', space=vmem, size = 0x10000, scoped, tag = 'input window, operand 1, single buffered']
    #allocation6 [shape = 's32[1]{0}', space=sflag, size = 0x4, scoped, tag = 'scoped memory for tpu_custom_call.1']
    #allocation7 [shape = 'u8[8192]{0}', space=vmem, size = 0x2000, scoped, tag = 'input window, operand 2, single buffered']
    #allocation8 [shape = 'u8[8192]{0}', space=vmem, size = 0x2000, scoped, tag = 'output window, operand 0']
    %8 = vsyncpa [#allocation3], 0
    %s9 = scalar_lea.sflag [#allocation3], 1
    %10 = vsyncpa %s9, 0
    %11 = vsyncpa [#allocation6], 0
    %12 = vsyncpa [#allocation4], 0
    %s13 = scalar_lea.sflag [#allocation4], 1
    %14 = vsyncpa %s13, 0
    loop: start=0, step=1, limit=4
    $region2: #{tpu_custom_call.1} parent=1 // loop_pre_header
      _
    $region3: #{tpu_custom_call.1} parent=1 // loop_header
      %s16 = sphi 0, %s20
      %p17 = scmp.ge.s32.totalorder %s16, 4
      %s23 = sphi 0, %s35
      %s24 = sphi 0, %s31
      %s25 = sphi 0, %s23
      %s26 = sphi 0, %s24
      %s27 = sphi 0, %s25
      %s28 = sphi 0, %s26
      %s38 = sphi 0, %s40
      %s41 = sphi 0, %s38
      %s42 = sphi 0, %s41
      %s58 = sphi 0, %s42
      %s62 = sphi 0, %s62
      %s64 = sphi 0, %s62
      %s65 = sphi 0, %s64
      %s79 = sphi 0, %s65
      %s85 = sphi 0, %s87
      %s88 = sphi 0, %s85
      %s89 = sphi 0, %s88
      %s105 = sphi 0, %s89
      %s113 = sphi 0, %s115
      %s116 = sphi 0, %s113
      %s117 = sphi 0, %s116
      %s133 = sphi 0, %s117
    $region4: #{tpu_custom_call.1} parent=1 // loop_header_branch
      %19 = sbr.rel (%p17) target = $region8
    $region5: #{tpu_custom_call.1} parent=1 // loop_body
      %s21 = ssub.s32 %s16, 1
      %s22 = ssub.s32 %s16, 2
      %s29 = sadd.s32 1, %s24
      %p30 = scmp.ge.s32.totalorder %s29, 2
      %s31 = scalar_select %p30, 0, %s29
      %s32 = sadd.s32 1, %s23
      %s33 = scalar_select %p30, %s32, %s23
      %p34 = scmp.ge.s32.totalorder %s33, 1
      %s35 = scalar_select %p34, 0, %s33
      %s36 = ssub.s32 %s24, %s31
      %p37 = scmp.eq.s32.totalorder %s36, 0
      %s39 = sadd.s32 %s38, 1
      %s40 = scalar_select %p37, %s38, %s39
      %p43 = pneg %p37
      %p44 = scmp.eq.s32.totalorder %s16, 1
      %p45 = por %p43, %p44
      %p46 = scmp.ne.s32.totalorder %s38, %s41
      %p47 = scmp.eq.s32.totalorder %s16, 0
      %p48 = por %p46, %p47
      %p49 = scmp.ne.s32.totalorder %s38, %s41
      %p50 = scmp.eq.s32.totalorder %s21, 1
      %p51 = por %p49, %p50
      %p52 = scmp.ne.s32.totalorder %s41, %s42
      %p53 = scmp.eq.s32.totalorder %s21, 0
      %p54 = por %p52, %p53
      %p55 = scmp.ne.s32.totalorder %s41, %s42
      %p56 = scmp.eq.s32.totalorder %s22, 1
      %p57 = por %p55, %p56
      %p59 = scmp.ne.s32.totalorder %s42, %s58
      %p60 = scmp.eq.s32.totalorder %s22, 0
      %p61 = por %p59, %p60
      %s63 = sadd.s32 %s62, 1
      %p66 = scmp.eq.s32.totalorder %s16, 1
      %p67 = scmp.ne.s32.totalorder %s62, %s64
      %p68 = scmp.eq.s32.totalorder %s16, 0
      %p69 = por %p67, %p68
      %p70 = scmp.ne.s32.totalorder %s62, %s64
      %p71 = scmp.eq.s32.totalorder %s21, 1
      %p72 = por %p70, %p71
      %p73 = scmp.ne.s32.totalorder %s64, %s65
      %p74 = scmp.eq.s32.totalorder %s21, 0
      %p75 = por %p73, %p74
      %p76 = scmp.ne.s32.totalorder %s64, %s65
      %p77 = scmp.eq.s32.totalorder %s22, 1
      %p78 = por %p76, %p77
      %p80 = scmp.ne.s32.totalorder %s65, %s79
      %p81 = scmp.eq.s32.totalorder %s22, 0
      %p82 = por %p80, %p81
      %s83 = ssub.s32 %s23, %s35
      %p84 = scmp.eq.s32.totalorder %s83, 0
      %s86 = sadd.s32 %s85, 1
      %s87 = scalar_select %p84, %s85, %s86
      %p90 = pneg %p84
      %p91 = scmp.eq.s32.totalorder %s16, 1
      %p92 = por %p90, %p91
      %p93 = scmp.ne.s32.totalorder %s85, %s88
      %p94 = scmp.eq.s32.totalorder %s16, 0
      %p95 = por %p93, %p94
      %p96 = scmp.ne.s32.totalorder %s85, %s88
      %p97 = scmp.eq.s32.totalorder %s21, 1
      %p98 = por %p96, %p97
      %p99 = scmp.ne.s32.totalorder %s88, %s89
      %p100 = scmp.eq.s32.totalorder %s21, 0
      %p101 = por %p99, %p100
      %p102 = scmp.ne.s32.totalorder %s88, %s89
      %p103 = scmp.eq.s32.totalorder %s22, 1
      %p104 = por %p102, %p103
      %p106 = scmp.ne.s32.totalorder %s89, %s105
      %p107 = scmp.eq.s32.totalorder %s22, 0
      %p108 = por %p106, %p107
      %s109 = ssub.s32 %s24, %s31
      %s110 = ssub.s32 %s23, %s35
      %s111 = sor.u32 %s109, %s110
      %p112 = scmp.eq.s32.totalorder %s111, 0
      %s114 = sadd.s32 %s113, 1
      %s115 = scalar_select %p112, %s113, %s114
      %p118 = pneg %p112
      %p119 = scmp.eq.s32.totalorder %s16, 1
      %p120 = por %p118, %p119
      %p121 = scmp.ne.s32.totalorder %s113, %s116
      %p122 = scmp.eq.s32.totalorder %s16, 0
      %p123 = por %p121, %p122
      %p124 = scmp.ne.s32.totalorder %s113, %s116
      %p125 = scmp.eq.s32.totalorder %s21, 1
      %p126 = por %p124, %p125
      %p127 = scmp.ne.s32.totalorder %s116, %s117
      %p128 = scmp.eq.s32.totalorder %s21, 0
      %p129 = por %p127, %p128
      %p130 = scmp.ne.s32.totalorder %s116, %s117
      %p131 = scmp.eq.s32.totalorder %s22, 1
      %p132 = por %p130, %p131
      %p134 = scmp.ne.s32.totalorder %s117, %s133
      %p135 = scmp.eq.s32.totalorder %s22, 0
      %p136 = por %p134, %p135
      %p137 = scmp.le.s32.totalorder 1, %s16
      %p138 = scmp.lt.s32.totalorder %s16, 3
      %p139 = pnand %p137, %p138
      %p140 = pneg %p139
      // Predicated region
      $region9: #{tpu_custom_call.1} parent=5 // pred_check
        _
      $region10: #{tpu_custom_call.1} parent=5 // pred_check_branch
        %142 = sbr.rel (%p139) target = $region12
      $region11: #{tpu_custom_call.1} parent=5 // pred_region
        %s143 = ssub.s32 %s16, 1
        // Predicated region
        $region13: #{tpu_custom_call.1} parent=11 // pred_check
          %p144 = pneg %p75
        $region14: #{tpu_custom_call.1} parent=11 // pred_check_branch
          %146 = sbr.rel (%p144) target = $region16
        $region15: #{tpu_custom_call.1} parent=11 // pred_region
          %s148 = ssub.s32 2048, 2048
          %149 = vsyncadd [#allocation6], %s148
          %s150 = sshll.u32 [#allocation5], 4
          %s151 = int_to_ptr.vmem [resolvable:$true] %s150
          %156 = dma.hbm_to_vmem [thread:$0]  %s1, 2048, %s151, [#allocation6], 128, 128, 8
        $region16: #{tpu_custom_call.1} parent=11 // pred_fallthru
          _
        // Predicated region
        $region17: #{tpu_custom_call.1} parent=11 // pred_check
          %p157 = pneg %p101
        $region18: #{tpu_custom_call.1} parent=11 // pred_check_branch
          %159 = sbr.rel (%p157) target = $region20
        $region19: #{tpu_custom_call.1} parent=11 // pred_region
          %s161 = ssub.s32 256, 256
          %162 = vsyncadd [#allocation6], %s161
          %s163 = smul.addr %s25, 128
          %s164 = scalar_lea.hbm %s2, %s163
          %s165 = sshll.u32 [#allocation7], 4
          %s166 = int_to_ptr.vmem [resolvable:$true] %s165
          %171 = dma.hbm_to_vmem [thread:$0]  %s164, 256, %s166, [#allocation6], 128, 128, 8
        $region20: #{tpu_custom_call.1} parent=11 // pred_fallthru
          _
      $region12: #{tpu_custom_call.1} parent=5 // pred_fallthru
        _
      %p172 = scmp.lt.s32.totalorder %s16, 2
      // Predicated region
      $region21: #{tpu_custom_call.1} parent=5 // pred_check
        %p173 = pneg %p172
      $region22: #{tpu_custom_call.1} parent=5 // pred_check_branch
        %175 = sbr.rel (%p173) target = $region24
      $region23: #{tpu_custom_call.1} parent=5 // pred_region
        // Predicated region
        $region25: #{tpu_custom_call.1} parent=23 // pred_check
          %p176 = pneg %p48
        $region26: #{tpu_custom_call.1} parent=23 // pred_check_branch
          %178 = sbr.rel (%p176) target = $region28
        $region27: #{tpu_custom_call.1} parent=23 // pred_region
          %s179 = sand.u32 %s38, 1
          %s180 = scalar_lea.sflag [#allocation3], %s179
          %s181 = sand.u32 %s38, 1
          %s182 = smul.addr %s181, 8
          %s183 = scalar_lea.vmem [#allocation2], %s182
          %s185 = ssub.s32 128, 128
          %186 = vsyncadd %s180, %s185
          %s187 = smul.addr %s24, 128
          %s188 = scalar_lea.hbm %s0, %s187
          %s190 = sshll.u32 %s183, 4
          %s191 = int_to_ptr.vmem [resolvable:$true] %s190
          %193 = dma.hbm_to_vmem [thread:$0]  %s188, 128, %s191, %s180
        $region28: #{tpu_custom_call.1} parent=23 // pred_fallthru
          _
      $region24: #{tpu_custom_call.1} parent=5 // pred_fallthru
        _
      %p194 = scmp.le.s32.totalorder 1, %s16
      %p195 = scmp.lt.s32.totalorder %s16, 3
      %p196 = pnand %p194, %p195
      %p197 = pneg %p196
      // Predicated region
      $region29: #{tpu_custom_call.1} parent=5 // pred_check
        _
      $region30: #{tpu_custom_call.1} parent=5 // pred_check_branch
        %199 = sbr.rel (%p196) target = $region32
      $region31: #{tpu_custom_call.1} parent=5 // pred_region
        %s200 = ssub.s32 %s16, 1
        %s201 = sand.u32 %s41, 1
        %s202 = scalar_lea.sflag [#allocation3], %s201
        %s203 = sand.u32 %s41, 1
        %s204 = smul.addr %s203, 8
        %s205 = scalar_lea.vmem [#allocation2], %s204
        // Predicated region
        $region33: #{tpu_custom_call.1} parent=31 // pred_check
          %p206 = pneg %p54
        $region34: #{tpu_custom_call.1} parent=31 // pred_check_branch
          %208 = sbr.rel (%p206) target = $region36
        $region35: #{tpu_custom_call.1} parent=31 // pred_region
          %209 = dma.done %s202, 128
        $region36: #{tpu_custom_call.1} parent=31 // pred_fallthru
          _
        // Predicated region
        $region37: #{tpu_custom_call.1} parent=31 // pred_check
          %p210 = pneg %p75
        $region38: #{tpu_custom_call.1} parent=31 // pred_check_branch
          %212 = sbr.rel (%p210) target = $region40
        $region39: #{tpu_custom_call.1} parent=31 // pred_region
          %213 = dma.done [#allocation6], 2048
        $region40: #{tpu_custom_call.1} parent=31 // pred_fallthru
          _
        // Predicated region
        $region41: #{tpu_custom_call.1} parent=31 // pred_check
          %p214 = pneg %p101
        $region42: #{tpu_custom_call.1} parent=31 // pred_check_branch
          %216 = sbr.rel (%p214) target = $region44
        $region43: #{tpu_custom_call.1} parent=31 // pred_region
          %217 = dma.done [#allocation6], 256
        $region44: #{tpu_custom_call.1} parent=31 // pred_fallthru
          _
        %s218 = sand.u32 %s41, 1
        %s219 = scalar_lea.sflag [#allocation3], %s218
        %s220 = sand.u32 %s41, 1
        %s221 = smul.addr %s220, 8
        %s222 = scalar_lea.vmem [#allocation2], %s221
        %p223 = pneg %p54
        %p224 = pneg %p51
        %p225 = pneg %p75
        %p226 = pneg %p72
        %p227 = pneg %p101
        %p228 = pneg %p98
        %p229 = pneg %p129
        %p230 = pneg %p126
        %s231 = sand.u32 %s116, 1
        %s232 = scalar_lea.sflag [#allocation4], %s231
        %s233 = sand.u32 %s116, 1
        %s234 = smul.addr %s233, 8
        %s235 = scalar_lea.vmem [#allocation8], %s234
        %v236 = vld [vmem:[%s205] sm:$0xff]
        %v237 = vld [vmem:[#allocation7] sm:$0xff]
        %v238 = vld [vmem:[#allocation7 + $0x8] sm:$0xff]
        %vm239 = vcmask 130048
        %v241 = vsel %vm239, %v236, 0
        %243 = vmatprep.subr.mxu0 0.0
        %244 = vmatpush1.msra.mxu0 %v237
        %245 = vmatprep.subr.mxu0 0.0
        %246 = vmatpush1.msra.mxu0 %v238
        %247 = vmatprep.subr.mxu0 0.0
        %248 = vmatpush1.msra.mxu0 0.0
        %249 = vmatprep.subr.mxu0 0.0
        %250 = vmatpush1.msra.mxu0 0.0
        %251 = vmatprep.subr.mxu0 0.0
        %252 = vmatpush1.msra.mxu0 0.0
        %253 = vmatprep.subr.mxu0 0.0
        %254 = vmatpush1.msra.mxu0 0.0
        %255 = vmatprep.subr.mxu0 0.0
        %256 = vmatpush1.msra.mxu0 0.0
        %257 = vmatprep.subr.mxu0 0.0
        %258 = vmatpush1.msra.mxu0 0.0
        %259 = vmatprep.subr.mxu0 0.0
        %260 = vmatpush1.msra.mxu0 0.0
        %261 = vmatprep.subr.mxu0 0.0
        %262 = vmatpush1.msra.mxu0 0.0
        %263 = vmatprep.subr.mxu0 0.0
        %264 = vmatpush1.msra.mxu0 0.0
        %265 = vmatprep.subr.mxu0 0.0
        %266 = vmatpush1.msra.mxu0 0.0
        %267 = vmatprep.subr.mxu0 0.0
        %268 = vmatpush1.msra.mxu0 0.0
        %269 = vmatprep.subr.mxu0 0.0
        %270 = vmatpush1.msra.mxu0 0.0
        %271 = vmatprep.subr.mxu0 0.0
        %272 = vmatpush1.msra.mxu0 0.0
        %273 = vmatprep.subr.mxu0 0.0
        %274 = vmatpush1.msra.mxu0 0.0
        %275 = vmatprep.subr.mxu0 0.0
        %276 = vmatpush1.msra.mxu0 0.0
        %277 = vmatprep.subr.mxu0 0.0
        %278 = vmatpush1.msra.mxu0 0.0
        %279 = vmatprep.subr.mxu0 0.0
        %280 = vmatpush1.msra.mxu0 0.0
        %281 = vmatprep.subr.mxu0 0.0
        %282 = vmatpush1.msra.mxu0 0.0
        %283 = vmatprep.subr.mxu0 0.0
        %284 = vmatpush1.msra.mxu0 0.0
        %285 = vmatprep.subr.mxu0 0.0
        %286 = vmatpush1.msra.mxu0 0.0
        %287 = vmatprep.subr.mxu0 0.0
        %288 = vmatpush1.msra.mxu0 0.0
        %289 = vmatprep.subr.mxu0 0.0
        %290 = vmatpush1.msra.mxu0 0.0
        %291 = vmatprep.subr.mxu0 0.0
        %292 = vmatpush1.msra.mxu0 0.0
        %293 = vmatprep.subr.mxu0 0.0
        %294 = vmatpush1.msra.mxu0 0.0
        %295 = vmatprep.subr.mxu0 0.0
        %296 = vmatpush1.msra.mxu0 0.0
        %297 = vmatprep.subr.mxu0 0.0
        %298 = vmatpush1.msra.mxu0 0.0
        %299 = vmatprep.subr.mxu0 0.0
        %300 = vmatpush1.msra.mxu0 0.0
        %301 = vmatprep.subr.mxu0 0.0
        %302 = vmatpush1.msra.mxu0 0.0
        %303 = vmatprep.subr.mxu0 0.0
        %304 = vmatpush1.msra.mxu0 0.0
        %305 = vmatprep.subr.mxu0 0.0
        %306 = vmatpush1.msra.mxu0 0.0
        %307 = vmatprep.mubr.f32.mxu0 0.0
        %308 = vmatmul.mubr.f32.gmra.mrb[0].mxu0 %v241
        %v309 = vpop.f32.mrb[0].mxu0
        %v310 = vadd.f32 0.0, %v309
        %v311 = vpop.f32.mrb[0].mxu0
        %312 = vdwg.mxu0
        %v313 = vld [vmem:[#allocation5] sm:$0xff]
        %v314 = vld [vmem:[#allocation5 + $0x8] sm:$0xff]
        %v315 = vld [vmem:[#allocation5 + $0x10] sm:$0xff]
        %v316 = vld [vmem:[#allocation5 + $0x18] sm:$0xff]
        %v317 = vld [vmem:[#allocation5 + $0x20] sm:$0xff]
        %v318 = vld [vmem:[#allocation5 + $0x28] sm:$0xff]
        %v319 = vld [vmem:[#allocation5 + $0x30] sm:$0xff]
        %v320 = vld [vmem:[#allocation5 + $0x38] sm:$0xff]
        %v321 = vld [vmem:[#allocation5 + $0x40] sm:$0xff]
        %v322 = vld [vmem:[#allocation5 + $0x48] sm:$0xff]
        %v323 = vld [vmem:[#allocation5 + $0x50] sm:$0xff]
        %v324 = vld [vmem:[#allocation5 + $0x58] sm:$0xff]
        %v325 = vld [vmem:[#allocation5 + $0x60] sm:$0xff]
        %v326 = vld [vmem:[#allocation5 + $0x68] sm:$0xff]
        %v327 = vld [vmem:[#allocation5 + $0x70] sm:$0xff]
        %v328 = vld [vmem:[#allocation5 + $0x78] sm:$0xff]
        %329 = vmatprep.subr.mxu0 0.0
        %330 = vmatpush1.msra.mxu0 %v313
        %331 = vmatprep.subr.mxu0 0.0
        %332 = vmatpush1.msra.mxu0 %v314
        %333 = vmatprep.subr.mxu0 0.0
        %334 = vmatpush1.msra.mxu0 %v315
        %335 = vmatprep.subr.mxu0 0.0
        %336 = vmatpush1.msra.mxu0 %v316
        %337 = vmatprep.subr.mxu0 0.0
        %338 = vmatpush1.msra.mxu0 %v317
        %339 = vmatprep.subr.mxu0 0.0
        %340 = vmatpush1.msra.mxu0 %v318
        %341 = vmatprep.subr.mxu0 0.0
        %342 = vmatpush1.msra.mxu0 %v319
        %343 = vmatprep.subr.mxu0 0.0
        %344 = vmatpush1.msra.mxu0 %v320
        %345 = vmatprep.subr.mxu0 0.0
        %346 = vmatpush1.msra.mxu0 %v321
        %347 = vmatprep.subr.mxu0 0.0
        %348 = vmatpush1.msra.mxu0 %v322
        %349 = vmatprep.subr.mxu0 0.0
        %350 = vmatpush1.msra.mxu0 %v323
        %351 = vmatprep.subr.mxu0 0.0
        %352 = vmatpush1.msra.mxu0 %v324
        %353 = vmatprep.subr.mxu0 0.0
        %354 = vmatpush1.msra.mxu0 %v325
        %355 = vmatprep.subr.mxu0 0.0
        %356 = vmatpush1.msra.mxu0 %v326
        %357 = vmatprep.subr.mxu0 0.0
        %358 = vmatpush1.msra.mxu0 %v327
        %359 = vmatprep.subr.mxu0 0.0
        %360 = vmatpush1.msra.mxu0 %v328
        %361 = vmatprep.subr.mxu0 0.0
        %362 = vmatpush1.msra.mxu0 0.0
        %363 = vmatprep.subr.mxu0 0.0
        %364 = vmatpush1.msra.mxu0 0.0
        %365 = vmatprep.subr.mxu0 0.0
        %366 = vmatpush1.msra.mxu0 0.0
        %367 = vmatprep.subr.mxu0 0.0
        %368 = vmatpush1.msra.mxu0 0.0
        %369 = vmatprep.subr.mxu0 0.0
        %370 = vmatpush1.msra.mxu0 0.0
        %371 = vmatprep.subr.mxu0 0.0
        %372 = vmatpush1.msra.mxu0 0.0
        %373 = vmatprep.subr.mxu0 0.0
        %374 = vmatpush1.msra.mxu0 0.0
        %375 = vmatprep.subr.mxu0 0.0
        %376 = vmatpush1.msra.mxu0 0.0
        %377 = vmatprep.subr.mxu0 0.0
        %378 = vmatpush1.msra.mxu0 0.0
        %379 = vmatprep.subr.mxu0 0.0
        %380 = vmatpush1.msra.mxu0 0.0
        %381 = vmatprep.subr.mxu0 0.0
        %382 = vmatpush1.msra.mxu0 0.0
        %383 = vmatprep.subr.mxu0 0.0
        %384 = vmatpush1.msra.mxu0 0.0
        %385 = vmatprep.subr.mxu0 0.0
        %386 = vmatpush1.msra.mxu0 0.0
        %387 = vmatprep.subr.mxu0 0.0
        %388 = vmatpush1.msra.mxu0 0.0
        %389 = vmatprep.subr.mxu0 0.0
        %390 = vmatpush1.msra.mxu0 0.0
        %391 = vmatprep.subr.mxu0 0.0
        %392 = vmatpush1.msra.mxu0 0.0
        %393 = vmatprep.mubr.f32.mxu0 0.0
        %394 = vmatmul.mubr.f32.gmra.mrb[0].mxu0 %v310
        %v395 = vpop.f32.mrb[0].mxu0
        %v396 = vadd.f32 0.0, %v395
        %v397 = vpop.f32.mrb[0].mxu0
        %398 = vdwg.mxu0
        %v399 = vmax.f32 %v396, 0.0
        %400 = vst [vmem:[%s235] sm:$0xff] %v399
        %s401 = sand.u32 %s116, 1
        %s402 = scalar_lea.sflag [#allocation4], %s401
        %s403 = sand.u32 %s116, 1
        %s404 = smul.addr %s403, 8
        %s405 = scalar_lea.vmem [#allocation8], %s404
        // Predicated region
        $region45: #{tpu_custom_call.1} parent=31 // pred_check
          %p406 = pneg %p126
        $region46: #{tpu_custom_call.1} parent=31 // pred_check_branch
          %408 = sbr.rel (%p406) target = $region48
        $region47: #{tpu_custom_call.1} parent=31 // pred_region
          %s410 = ssub.s32 128, 128
          %411 = vsyncadd %s402, %s410
          %s412 = sadd.s32 %s25, %s26
          %s413 = smul.addr %s412, 128
          %s414 = scalar_lea.hbm %s3, %s413
          %s416 = sshll.u32 %s405, 4
          %s417 = int_to_ptr.vmem [resolvable:$true] %s416
          %419 = dma.vmem_to_hbm [thread:$0]  %s417, 128, %s414, %s402
        $region48: #{tpu_custom_call.1} parent=31 // pred_fallthru
          _
      $region32: #{tpu_custom_call.1} parent=5 // pred_fallthru
        _
      %p420 = scmp.le.s32.totalorder 2, %s16
      // Predicated region
      $region49: #{tpu_custom_call.1} parent=5 // pred_check
        %p421 = pneg %p420
      $region50: #{tpu_custom_call.1} parent=5 // pred_check_branch
        %423 = sbr.rel (%p421) target = $region52
      $region51: #{tpu_custom_call.1} parent=5 // pred_region
        %s424 = ssub.s32 %s16, 2
        // Predicated region
        $region53: #{tpu_custom_call.1} parent=51 // pred_check
          %p425 = pneg %p132
        $region54: #{tpu_custom_call.1} parent=51 // pred_check_branch
          %427 = sbr.rel (%p425) target = $region56
        $region55: #{tpu_custom_call.1} parent=51 // pred_region
          %s428 = sand.u32 %s117, 1
          %s429 = scalar_lea.sflag [#allocation4], %s428
          %s430 = sand.u32 %s117, 1
          %s431 = smul.addr %s430, 8
          %s432 = scalar_lea.vmem [#allocation8], %s431
          %433 = dma.done %s429, 128
        $region56: #{tpu_custom_call.1} parent=51 // pred_fallthru
          _
      $region52: #{tpu_custom_call.1} parent=5 // pred_fallthru
        _
    $region6: #{tpu_custom_call.1} parent=1 // loop_footer
      %s20 = sadd.s32 1, %s16
    $region7: #{tpu_custom_call.1} parent=1 // loop_footer_branch
      %15 = sbr.rel target = $region3
    $region8: #{tpu_custom_call.1} parent=1 // loop_exit
      _
    %434 = vsyncpa [#allocation3], 1
    %s435 = scalar_lea.sflag [#allocation3], 1
    %436 = vsyncpa %s435, 1
    %437 = vsyncpa [#allocation6], 1
    %438 = vsyncpa [#allocation4], 1
    %s439 = scalar_lea.sflag [#allocation4], 1
    %440 = vsyncpa %s439, 1

</llo_original>
